<compile_context>
chip_gen: v7x
topology: tpu7x:2x2x1
jax: 0.10.0
libtpu: 0.0.40
codegen_flags: <defaults>
</compile_context>

<pallas_src>
import functools
import math

import jax
import jax.numpy as jnp
from jax.experimental import pallas as pl
from jax.experimental.pallas import tpu as pltpu


SHRINK_THRES = 0.0025
HSR_EPS = 1e-12       # epsilon in hard_shrink_relu
NORM_EPS = 1e-12      # F.normalize clamp epsilon


def _date_memory_kernel(x_ref, date_ref, mem_t_ref, mem_ref, dmap_t_ref,
                        out_ref, att_ref, *, matmul_dtype=None):
    x = x_ref[...]              # (TN, F)
    d = date_ref[...]           # (TN, 2)
    mem_t = mem_t_ref[...]      # (F, M)   == mem_unit.T
    mem = mem_ref[...]          # (M, F)   == mem_unit
    dmap_t = dmap_t_ref[...]    # (2, M)   == date_map.T

    # ---- value attention: x @ mem_unit.T, natural [N,K]x[K,M] MXU layout ----
    if matmul_dtype is not None:
        value_att = jnp.dot(x.astype(matmul_dtype), mem_t.astype(matmul_dtype),
                            preferred_element_type=jnp.float32)
    else:
        value_att = jnp.dot(x, mem_t, preferred_element_type=jnp.float32)

    # ---- date attention: K=2 contraction done on the VPU (broadcast-FMA) ----
    date_att = d[:, 0:1] * dmap_t[0:1, :] + d[:, 1:2] * dmap_t[1:2, :]
    date_att = jnp.maximum(date_att, 0.0)          # relu

    w = value_att * date_att                        # (TN, M)

    # ---- softmax over the memory axis (dim=1) ----
    w_max = jnp.max(w, axis=1, keepdims=True)
    w_exp = jnp.exp(w - w_max)
    inv_sum = pl.reciprocal(jnp.sum(w_exp, axis=1, keepdims=True), approx=True)
    w = w_exp * inv_sum

    # ---- hard_shrink_relu: relu(w - lambd) * w / (|w - lambd| + eps) ----
    # (exact divide kept so near-threshold behavior matches the reference)
    shifted = w - SHRINK_THRES
    w = jnp.maximum(shifted, 0.0) * w / (jnp.abs(shifted) + HSR_EPS)

    # ---- L1 normalize over dim=1 (F.normalize(p=1, dim=1), eps clamp) ----
    l1 = jnp.sum(jnp.abs(w), axis=1, keepdims=True)
    w = w * pl.reciprocal(jnp.maximum(l1, NORM_EPS), approx=True)

    att_ref[...] = w

    # ---- output = att @ mem_unit ----
    if matmul_dtype is not None:
        out_ref[...] = jnp.dot(w.astype(matmul_dtype), mem.astype(matmul_dtype),
                               preferred_element_type=jnp.float32)
    else:
        out_ref[...] = jnp.dot(w, mem, preferred_element_type=jnp.float32)


def date_memory_unit_forward(input_data, date_vector, mem_unit, date_map,
                             *, row_tile=512, use_bf16_matmul=False):
    """Pallas implementation of DateMemoryUnit.forward.

    Returns dict with 'output' (N, fea_dim) and 'att' (N, mem_dim)."""
    input_data = input_data.astype(jnp.float32)
    date_vector = date_vector.astype(jnp.float32)
    mem_unit = mem_unit.astype(jnp.float32)
    date_map = date_map.astype(jnp.float32)

    n, fea_dim = input_data.shape
    mem_dim = mem_unit.shape[0]

    # ---- choose the row tile ----
    # Start from the requested tile, never exceed what the batch needs, keep a
    # multiple of 8 (sublane), and cap it so the double-buffered per-step tiles
    # (x + out + att + date) stay well inside the smallest (v7x, 32 MiB) scoped
    # VMEM budget, leaving headroom for the resident memory operands.
    tn = min(row_tile, max(8, ((n + 7) // 8) * 8))
    tn = ((tn + 7) // 8) * 8
    bytes_per_row = 4 * (2 * fea_dim + mem_dim + 2)   # x + out + att + date
    vmem_budget = 24 * 1024 * 1024
    max_rows = max(8, (vmem_budget // (2 * bytes_per_row)) // 8 * 8)
    tn = min(tn, max_rows)

    # pad N up to a multiple of the row tile (padded rows sliced off at the end)
    n_pad = ((n + tn - 1) // tn) * tn
    if n_pad != n:
        pad = n_pad - n
        input_data = jnp.pad(input_data, ((0, pad), (0, 0)))
        date_vector = jnp.pad(date_vector, ((0, pad), (0, 0)))

    # pre-transposed, read-only copies so both matmuls and the VPU date
    # projection see their natural layouts (tiny, done once in the wrapper)
    mem_t = jnp.transpose(mem_unit)     # (F, M)
    dmap_t = jnp.transpose(date_map)    # (2, M)

    kernel = functools.partial(
        _date_memory_kernel,
        matmul_dtype=jnp.bfloat16 if use_bf16_matmul else None,
    )

    out, att = pl.pallas_call(
        kernel,
        out_shape=(
            jax.ShapeDtypeStruct((n_pad, fea_dim), jnp.float32),
            jax.ShapeDtypeStruct((n_pad, mem_dim), jnp.float32),
        ),
        grid=(n_pad // tn,),
        in_specs=[
            pl.BlockSpec((tn, fea_dim), lambda i: (i, 0)),        # x tile
            pl.BlockSpec((tn, 2), lambda i: (i, 0)),              # date tile
            pl.BlockSpec((fea_dim, mem_dim), lambda i: (0, 0)),   # mem.T (resident)
            pl.BlockSpec((mem_dim, fea_dim), lambda i: (0, 0)),   # mem   (resident)
            pl.BlockSpec((2, mem_dim), lambda i: (0, 0)),         # date_map.T (resident)
        ],
        out_specs=(
            pl.BlockSpec((tn, fea_dim), lambda i: (i, 0)),        # output tile
            pl.BlockSpec((tn, mem_dim), lambda i: (i, 0)),        # att tile
        ),
        compiler_params=pltpu.CompilerParams(
            dimension_semantics=("parallel",),
        ),
    )(input_data, date_vector, mem_t, mem_unit, dmap_t)

    if n_pad != n:
        out = out[:n]
        att = att[:n]
    return {"output": out, "att": att}


def build_cycle_date_vector(total_len):
    idx = jnp.arange(total_len, dtype=jnp.float32)
    ang = 2.0 * jnp.pi * idx / total_len
    return jnp.stack([jnp.sin(ang), jnp.cos(ang)], axis=1).astype(jnp.float32)


def _reference_forward(input_data, date_vector, mem_unit, date_map):
    """Pure-JAX reference (mirrors the PyTorch module) for validation."""
    value_att = input_data @ mem_unit.T
    date_att = jnp.maximum(date_vector @ date_map.T, 0.0)
    w = value_att * date_att
    w = jax.nn.softmax(w, axis=1)
    shifted = w - SHRINK_THRES
    w = jnp.maximum(shifted, 0.0) * w / (jnp.abs(shifted) + HSR_EPS)
    l1 = jnp.sum(jnp.abs(w), axis=1, keepdims=True)
    w = w / jnp.maximum(l1, NORM_EPS)
    return {"output": w @ mem_unit, "att": w}


if __name__ == "__main__":
    # small, deterministic example shapes consistent with the module
    N = 24         # batch of feature vectors
    FEA_DIM = 32   # feature dimension
    MEM_DIM = 16   # number of memory slots

    key = jax.random.PRNGKey(0)
    k_x, k_d, k_m = jax.random.split(key, 3)

    # module parameter init: mem_unit ~ U(-stdv, stdv), stdv = 1/sqrt(fea_dim)
    stdv = 1.0 / math.sqrt(FEA_DIM)
    mem_unit = jax.random.uniform(
        k_m, (MEM_DIM, FEA_DIM), dtype=jnp.float32, minval=-stdv, maxval=stdv
    )
    date_map = build_cycle_date_vector(MEM_DIM)   # (MEM_DIM, 2), fixed buffer

    input_data = jax.random.normal(k_x, (N, FEA_DIM), dtype=jnp.float32)
    # date vectors on the unit circle, like the cycle encoding
    phase = jax.random.uniform(k_d, (N,), dtype=jnp.float32) * 2.0 * jnp.pi
    date_vector = jnp.stack([jnp.sin(phase), jnp.cos(phase)], axis=1)

    # small row_tile here just to exercise a multi-step pipelined grid
    result = date_memory_unit_forward(
        input_data, date_vector, mem_unit, date_map, row_tile=8
    )
    jax.block_until_ready(result["output"])
    jax.block_until_ready(result["att"])

    assert result["output"].shape == (N, FEA_DIM)
    assert result["att"].shape == (N, MEM_DIM)

    # correctness check against a pure-JAX reference (loose tolerance to
    # accommodate the approx EUP reciprocals in the normalizations)
    ref = _reference_forward(input_data, date_vector, mem_unit, date_map)
    assert jnp.allclose(result["att"], ref["att"], rtol=2e-2, atol=1e-3)
    assert jnp.allclose(result["output"], ref["output"], rtol=2e-2, atol=1e-3)

    print("KERNEL_OK")
</pallas_src>

<mosaic_0001>
module attributes {stable_mosaic.version = 11 : i64} {
  func.func @_date_memory_kernel(%arg0: i32, %arg1: memref<8x32xf32, #tpu.memory_space<vmem>>, %arg2: memref<8x2xf32, #tpu.memory_space<vmem>>, %arg3: memref<32x16xf32, #tpu.memory_space<vmem>>, %arg4: memref<16x32xf32, #tpu.memory_space<vmem>>, %arg5: memref<2x16xf32, #tpu.memory_space<vmem>>, %arg6: memref<8x32xf32, #tpu.memory_space<vmem>>, %arg7: memref<8x16xf32, #tpu.memory_space<vmem>>) attributes {dimension_semantics = [#tpu.dimension_semantics<parallel>], iteration_bounds = array<i64: 3>, scalar_prefetch = 0 : i64, scratch_operands = 0 : i64, tpu.core_type = #tpu.core_type<tc>, window_params = [{transform_indices = @transform_0, window_bounds = array<i64: 8, 32>}, {transform_indices = @transform_1, window_bounds = array<i64: 8, 2>}, {pipeline_mode = #tpu.pipeline_mode<synchronous>, transform_indices = @transform_2, window_bounds = array<i64: 32, 16>}, {pipeline_mode = #tpu.pipeline_mode<synchronous>, transform_indices = @transform_3, window_bounds = array<i64: 16, 32>}, {pipeline_mode = #tpu.pipeline_mode<synchronous>, transform_indices = @transform_4, window_bounds = array<i64: 2, 16>}, {transform_indices = @transform_5, window_bounds = array<i64: 8, 32>}, {transform_indices = @transform_6, window_bounds = array<i64: 8, 16>}]} {
    %c0 = arith.constant 0 : index
    %c0_0 = arith.constant 0 : index
    %0 = vector.load %arg1[%c0, %c0_0] : memref<8x32xf32, #tpu.memory_space<vmem>>, vector<8x32xf32>
    %c0_1 = arith.constant 0 : index
    %c0_2 = arith.constant 0 : index
    %1 = vector.load %arg2[%c0_1, %c0_2] : memref<8x2xf32, #tpu.memory_space<vmem>>, vector<8x2xf32>
    %c0_3 = arith.constant 0 : index
    %c0_4 = arith.constant 0 : index
    %2 = vector.load %arg3[%c0_3, %c0_4] : memref<32x16xf32, #tpu.memory_space<vmem>>, vector<32x16xf32>
    %c0_5 = arith.constant 0 : index
    %c0_6 = arith.constant 0 : index
    %3 = vector.load %arg4[%c0_5, %c0_6] : memref<16x32xf32, #tpu.memory_space<vmem>>, vector<16x32xf32>
    %c0_7 = arith.constant 0 : index
    %c0_8 = arith.constant 0 : index
    %4 = vector.load %arg5[%c0_7, %c0_8] : memref<2x16xf32, #tpu.memory_space<vmem>>, vector<2x16xf32>
    %cst = arith.constant dense<0.000000e+00> : vector<8x16xf32>
    %5 = tpu.matmul %0, %2, %cst {dimension_numbers = #tpu.dot_dimension_numbers<[1], [0], [0], [1], [0, 0, 1, 1], [], []>} : vector<8x32xf32>, vector<32x16xf32>, vector<8x16xf32> -> vector<8x16xf32>
    %6 = vector.extract_strided_slice %1 {offsets = [0, 0], sizes = [8, 1], strides = [1, 1]} : vector<8x2xf32> to vector<8x1xf32>
    %7 = vector.extract_strided_slice %4 {offsets = [0, 0], sizes = [1, 16], strides = [1, 1]} : vector<2x16xf32> to vector<1x16xf32>
    %8 = vector.broadcast %6 : vector<8x1xf32> to vector<8x16xf32>
    %9 = vector.broadcast %7 : vector<1x16xf32> to vector<8x16xf32>
    %10 = arith.mulf %8, %9 : vector<8x16xf32>
    %11 = vector.extract_strided_slice %1 {offsets = [0, 1], sizes = [8, 1], strides = [1, 1]} : vector<8x2xf32> to vector<8x1xf32>
    %12 = vector.extract_strided_slice %4 {offsets = [1, 0], sizes = [1, 16], strides = [1, 1]} : vector<2x16xf32> to vector<1x16xf32>
    %13 = vector.broadcast %11 : vector<8x1xf32> to vector<8x16xf32>
    %14 = vector.broadcast %12 : vector<1x16xf32> to vector<8x16xf32>
    %15 = arith.mulf %13, %14 : vector<8x16xf32>
    %16 = arith.addf %10, %15 : vector<8x16xf32>
    %cst_9 = arith.constant 0.000000e+00 : f32
    %17 = vector.broadcast %cst_9 : f32 to vector<8x16xf32>
    %18 = arith.maximumf %16, %17 : vector<8x16xf32>
    %19 = arith.mulf %5, %18 : vector<8x16xf32>
    %cst_10 = arith.constant dense<0xFF800000> : vector<8xf32>
    %20 = vector.multi_reduction <maximumf>, %19, %cst_10 [1] : vector<8x16xf32> to vector<8xf32>
    %21 = vector.shape_cast %20 : vector<8xf32> to vector<8x1xf32>
    %22 = vector.broadcast %21 : vector<8x1xf32> to vector<8x16xf32>
    %23 = arith.subf %19, %22 : vector<8x16xf32>
    %24 = math.exp %23 : vector<8x16xf32>
    %cst_11 = arith.constant dense<0.000000e+00> : vector<8xf32>
    %25 = vector.multi_reduction <add>, %24, %cst_11 [1] : vector<8x16xf32> to vector<8xf32>
    %26 = vector.shape_cast %25 : vector<8xf32> to vector<8x1xf32>
    %27 = tpu.reciprocal %26 {approx = true} : vector<8x1xf32> -> vector<8x1xf32>
    %28 = vector.broadcast %27 : vector<8x1xf32> to vector<8x16xf32>
    %29 = arith.mulf %24, %28 : vector<8x16xf32>
    %cst_12 = arith.constant 2.500000e-03 : f32
    %30 = vector.broadcast %cst_12 : f32 to vector<8x16xf32>
    %31 = arith.subf %29, %30 : vector<8x16xf32>
    %cst_13 = arith.constant 0.000000e+00 : f32
    %32 = vector.broadcast %cst_13 : f32 to vector<8x16xf32>
    %33 = arith.maximumf %31, %32 : vector<8x16xf32>
    %34 = arith.mulf %33, %29 : vector<8x16xf32>
    %35 = math.absf %31 : vector<8x16xf32>
    %cst_14 = arith.constant 9.99999996E-13 : f32
    %36 = vector.broadcast %cst_14 : f32 to vector<8x16xf32>
    %37 = arith.addf %35, %36 : vector<8x16xf32>
    %38 = arith.divf %34, %37 : vector<8x16xf32>
    %39 = math.absf %38 : vector<8x16xf32>
    %cst_15 = arith.constant dense<0.000000e+00> : vector<8xf32>
    %40 = vector.multi_reduction <add>, %39, %cst_15 [1] : vector<8x16xf32> to vector<8xf32>
    %41 = vector.shape_cast %40 : vector<8xf32> to vector<8x1xf32>
    %cst_16 = arith.constant 9.99999996E-13 : f32
    %42 = vector.broadcast %cst_16 : f32 to vector<8x1xf32>
    %43 = arith.maximumf %41, %42 : vector<8x1xf32>
    %44 = tpu.reciprocal %43 {approx = true} : vector<8x1xf32> -> vector<8x1xf32>
    %45 = vector.broadcast %44 : vector<8x1xf32> to vector<8x16xf32>
    %46 = arith.mulf %38, %45 : vector<8x16xf32>
    %c0_17 = arith.constant 0 : index
    %c0_18 = arith.constant 0 : index
    %47 = vector.load %arg7[%c0_17, %c0_18] : memref<8x16xf32, #tpu.memory_space<vmem>>, vector<8x16xf32>
    tpu.vector_store %arg7[%c0_17, %c0_18], %46 {strides = array<i32>} : memref<8x16xf32, #tpu.memory_space<vmem>>, vector<8x16xf32>,
    %cst_19 = arith.constant dense<0.000000e+00> : vector<8x32xf32>
    %48 = tpu.matmul %46, %3, %cst_19 {dimension_numbers = #tpu.dot_dimension_numbers<[1], [0], [0], [1], [0, 0, 1, 1], [], []>} : vector<8x16xf32>, vector<16x32xf32>, vector<8x32xf32> -> vector<8x32xf32>
    %c0_20 = arith.constant 0 : index
    %c0_21 = arith.constant 0 : index
    %49 = vector.load %arg6[%c0_20, %c0_21] : memref<8x32xf32, #tpu.memory_space<vmem>>, vector<8x32xf32>
    tpu.vector_store %arg6[%c0_20, %c0_21], %48 {strides = array<i32>} : memref<8x32xf32, #tpu.memory_space<vmem>>, vector<8x32xf32>,
    return
  }
  func.func @transform_0(%arg0: i32) -> (i32, i32) {
    %c0_i32 = arith.constant 0 : i32
    %c0_i32_0 = arith.constant 0 : i32
    return %arg0, %c0_i32 : i32, i32
  }
  func.func @transform_1(%arg0: i32) -> (i32, i32) {
    %c0_i32 = arith.constant 0 : i32
    %c0_i32_0 = arith.constant 0 : i32
    return %arg0, %c0_i32 : i32, i32
  }
  func.func @transform_2(%arg0: i32) -> (i32, i32) {
    %c0_i32 = arith.constant 0 : i32
    %c0_i32_0 = arith.constant 0 : i32
    %c0_i32_1 = arith.constant 0 : i32
    return %c0_i32, %c0_i32_0 : i32, i32
  }
  func.func @transform_3(%arg0: i32) -> (i32, i32) {
    %c0_i32 = arith.constant 0 : i32
    %c0_i32_0 = arith.constant 0 : i32
    %c0_i32_1 = arith.constant 0 : i32
    return %c0_i32, %c0_i32_0 : i32, i32
  }
  func.func @transform_4(%arg0: i32) -> (i32, i32) {
    %c0_i32 = arith.constant 0 : i32
    %c0_i32_0 = arith.constant 0 : i32
    %c0_i32_1 = arith.constant 0 : i32
    return %c0_i32, %c0_i32_0 : i32, i32
  }
  func.func @transform_5(%arg0: i32) -> (i32, i32) {
    %c0_i32 = arith.constant 0 : i32
    %c0_i32_0 = arith.constant 0 : i32
    return %arg0, %c0_i32 : i32, i32
  }
  func.func @transform_6(%arg0: i32) -> (i32, i32) {
    %c0_i32 = arith.constant 0 : i32
    %c0_i32_0 = arith.constant 0 : i32
    return %arg0, %c0_i32 : i32, i32
  }
}

</mosaic_0001>

<llo_original>
// kernel: tpu_custom_call.1
$region0: #{tpu_custom_call.1}
  #allocation0 [shape = 'u32[]', space=smem, size = 0x4, offset = 0x4, fixed_abs, tag = 'smem constant byte address 0x4 - core index']
  #allocation1 [shape = 'u32[144,128]{1,0:T(1,128)}', space=vmem, size = 0x12000, scoped, tag = 'internal scratch']
  %s0 = inlined_call_operand.vmem [shape: f32[24,32], index: 0, kind: input, shape index: {}]
  %s1 = inlined_call_operand.vmem [shape: f32[24,2], index: 1, kind: input, shape index: {}]
  %s2 = inlined_call_operand.vmem [shape: f32[32,16], index: 2, kind: input, shape index: {}]
  %s3 = inlined_call_operand.vmem [shape: f32[16,32], index: 3, kind: input, shape index: {}]
  %s4 = inlined_call_operand.vmem [shape: f32[2,16], index: 4, kind: input, shape index: {}]
  %s5 = inlined_call_operand.hbm [shape: f32[24,32], index: 5, kind: output, shape index: {0}]
  %s6 = inlined_call_operand.vmem [shape: f32[24,16], index: 6, kind: output, shape index: {1}]
  %7 = xla_tuple %s5, %s6
  %s8 = sld [smem:[#allocation0]]
  $region61: #{tpu_custom_call.1} parent=0
    _
  %s10 = ssub.s32 1, %s8
  %s11 = scalar_select 0, %s10, %s8
  $region1: #{tpu_custom_call.1} parent=0
    #allocation2 [shape = 'u8[8192]{0}', space=vmem, size = 0x2000, scoped, tag = 'output window, operand 0']
    #allocation3 [shape = 's32[2]{0}', space=sflag, size = 0x8, scoped, tag = 'scoped memory for tpu_custom_call.1']
    %12 = vsyncpa [#allocation3], 0
    %s13 = scalar_lea.sflag [#allocation3], 1
    %14 = vsyncpa %s13, 0
    loop: start=0, step=1, limit=5
    $region2: #{tpu_custom_call.1} parent=1 // loop_pre_header
      _
    $region3: #{tpu_custom_call.1} parent=1 // loop_header
      %s16 = sphi 0, %s20
      %p17 = scmp.ge.s32.totalorder %s16, 5
      %s26 = sphi 0, %s28
      %s29 = sphi 0, %s26
      %s30 = sphi 0, %s29
      %s46 = sphi 0, %s30
      %s52 = sphi 0, %s54
      %s55 = sphi 0, %s52
      %s56 = sphi 0, %s55
      %s72 = sphi 0, %s56
      %s76 = sphi 0, %s76
      %s78 = sphi 0, %s76
      %s79 = sphi 0, %s78
      %s93 = sphi 0, %s79
      %s97 = sphi 0, %s97
      %s99 = sphi 0, %s97
      %s100 = sphi 0, %s99
      %s114 = sphi 0, %s100
      %s118 = sphi 0, %s118
      %s120 = sphi 0, %s118
      %s121 = sphi 0, %s120
      %s135 = sphi 0, %s121
      %s141 = sphi 0, %s143
      %s144 = sphi 0, %s141
      %s145 = sphi 0, %s144
      %s161 = sphi 0, %s145
      %s167 = sphi 0, %s169
      %s170 = sphi 0, %s167
      %s171 = sphi 0, %s170
      %s187 = sphi 0, %s171
    $region4: #{tpu_custom_call.1} parent=1 // loop_header_branch
      %19 = sbr.rel (%p17) target = $region8
    $region5: #{tpu_custom_call.1} parent=1 // loop_body
      %s21 = ssub.s32 %s16, 1
      %s22 = ssub.s32 %s16, 2
      %s23 = sadd.s32 %s16, 1
      %s24 = ssub.s32 %s16, %s23
      %p25 = scmp.eq.s32.totalorder %s24, 0
      %s27 = sadd.s32 %s26, 1
      %s28 = scalar_select %p25, %s26, %s27
      %p31 = pneg %p25
      %p32 = scmp.eq.s32.totalorder %s16, 2
      %p33 = por %p31, %p32
      %p34 = scmp.ne.s32.totalorder %s26, %s29
      %p35 = scmp.eq.s32.totalorder %s16, 0
      %p36 = por %p34, %p35
      %p37 = scmp.ne.s32.totalorder %s26, %s29
      %p38 = scmp.eq.s32.totalorder %s21, 2
      %p39 = por %p37, %p38
      %p40 = scmp.ne.s32.totalorder %s29, %s30
      %p41 = scmp.eq.s32.totalorder %s21, 0
      %p42 = por %p40, %p41
      %p43 = scmp.ne.s32.totalorder %s29, %s30
      %p44 = scmp.eq.s32.totalorder %s22, 2
      %p45 = por %p43, %p44
      %p47 = scmp.ne.s32.totalorder %s30, %s46
      %p48 = scmp.eq.s32.totalorder %s22, 0
      %p49 = por %p47, %p48
      %s50 = ssub.s32 %s16, %s23
      %p51 = scmp.eq.s32.totalorder %s50, 0
      %s53 = sadd.s32 %s52, 1
      %s54 = scalar_select %p51, %s52, %s53
      %p57 = pneg %p51
      %p58 = scmp.eq.s32.totalorder %s16, 2
      %p59 = por %p57, %p58
      %p60 = scmp.ne.s32.totalorder %s52, %s55
      %p61 = scmp.eq.s32.totalorder %s16, 0
      %p62 = por %p60, %p61
      %p63 = scmp.ne.s32.totalorder %s52, %s55
      %p64 = scmp.eq.s32.totalorder %s21, 2
      %p65 = por %p63, %p64
      %p66 = scmp.ne.s32.totalorder %s55, %s56
      %p67 = scmp.eq.s32.totalorder %s21, 0
      %p68 = por %p66, %p67
      %p69 = scmp.ne.s32.totalorder %s55, %s56
      %p70 = scmp.eq.s32.totalorder %s22, 2
      %p71 = por %p69, %p70
      %p73 = scmp.ne.s32.totalorder %s56, %s72
      %p74 = scmp.eq.s32.totalorder %s22, 0
      %p75 = por %p73, %p74
      %s77 = sadd.s32 %s76, 1
      %p80 = scmp.eq.s32.totalorder %s16, 2
      %p81 = scmp.ne.s32.totalorder %s76, %s78
      %p82 = scmp.eq.s32.totalorder %s16, 0
      %p83 = por %p81, %p82
      %p84 = scmp.ne.s32.totalorder %s76, %s78
      %p85 = scmp.eq.s32.totalorder %s21, 2
      %p86 = por %p84, %p85
      %p87 = scmp.ne.s32.totalorder %s78, %s79
      %p88 = scmp.eq.s32.totalorder %s21, 0
      %p89 = por %p87, %p88
      %p90 = scmp.ne.s32.totalorder %s78, %s79
      %p91 = scmp.eq.s32.totalorder %s22, 2
      %p92 = por %p90, %p91
      %p94 = scmp.ne.s32.totalorder %s79, %s93
      %p95 = scmp.eq.s32.totalorder %s22, 0
      %p96 = por %p94, %p95
      %s98 = sadd.s32 %s97, 1
      %p101 = scmp.eq.s32.totalorder %s16, 2
      %p102 = scmp.ne.s32.totalorder %s97, %s99
      %p103 = scmp.eq.s32.totalorder %s16, 0
      %p104 = por %p102, %p103
      %p105 = scmp.ne.s32.totalorder %s97, %s99
      %p106 = scmp.eq.s32.totalorder %s21, 2
      %p107 = por %p105, %p106
      %p108 = scmp.ne.s32.totalorder %s99, %s100
      %p109 = scmp.eq.s32.totalorder %s21, 0
      %p110 = por %p108, %p109
      %p111 = scmp.ne.s32.totalorder %s99, %s100
      %p112 = scmp.eq.s32.totalorder %s22, 2
      %p113 = por %p111, %p112
      %p115 = scmp.ne.s32.totalorder %s100, %s114
      %p116 = scmp.eq.s32.totalorder %s22, 0
      %p117 = por %p115, %p116
      %s119 = sadd.s32 %s118, 1
      %p122 = scmp.eq.s32.totalorder %s16, 2
      %p123 = scmp.ne.s32.totalorder %s118, %s120
      %p124 = scmp.eq.s32.totalorder %s16, 0
      %p125 = por %p123, %p124
      %p126 = scmp.ne.s32.totalorder %s118, %s120
      %p127 = scmp.eq.s32.totalorder %s21, 2
      %p128 = por %p126, %p127
      %p129 = scmp.ne.s32.totalorder %s120, %s121
      %p130 = scmp.eq.s32.totalorder %s21, 0
      %p131 = por %p129, %p130
      %p132 = scmp.ne.s32.totalorder %s120, %s121
      %p133 = scmp.eq.s32.totalorder %s22, 2
      %p134 = por %p132, %p133
      %p136 = scmp.ne.s32.totalorder %s121, %s135
      %p137 = scmp.eq.s32.totalorder %s22, 0
      %p138 = por %p136, %p137
      %s139 = ssub.s32 %s16, %s23
      %p140 = scmp.eq.s32.totalorder %s139, 0
      %s142 = sadd.s32 %s141, 1
      %s143 = scalar_select %p140, %s141, %s142
      %p146 = pneg %p140
      %p147 = scmp.eq.s32.totalorder %s16, 2
      %p148 = por %p146, %p147
      %p149 = scmp.ne.s32.totalorder %s141, %s144
      %p150 = scmp.eq.s32.totalorder %s16, 0
      %p151 = por %p149, %p150
      %p152 = scmp.ne.s32.totalorder %s141, %s144
      %p153 = scmp.eq.s32.totalorder %s21, 2
      %p154 = por %p152, %p153
      %p155 = scmp.ne.s32.totalorder %s144, %s145
      %p156 = scmp.eq.s32.totalorder %s21, 0
      %p157 = por %p155, %p156
      %p158 = scmp.ne.s32.totalorder %s144, %s145
      %p159 = scmp.eq.s32.totalorder %s22, 2
      %p160 = por %p158, %p159
      %p162 = scmp.ne.s32.totalorder %s145, %s161
      %p163 = scmp.eq.s32.totalorder %s22, 0
      %p164 = por %p162, %p163
      %s165 = ssub.s32 %s16, %s23
      %p166 = scmp.eq.s32.totalorder %s165, 0
      %s168 = sadd.s32 %s167, 1
      %s169 = scalar_select %p166, %s167, %s168
      %p172 = pneg %p166
      %p173 = scmp.eq.s32.totalorder %s16, 2
      %p174 = por %p172, %p173
      %p175 = scmp.ne.s32.totalorder %s167, %s170
      %p176 = scmp.eq.s32.totalorder %s16, 0
      %p177 = por %p175, %p176
      %p178 = scmp.ne.s32.totalorder %s167, %s170
      %p179 = scmp.eq.s32.totalorder %s21, 2
      %p180 = por %p178, %p179
      %p181 = scmp.ne.s32.totalorder %s170, %s171
      %p182 = scmp.eq.s32.totalorder %s21, 0
      %p183 = por %p181, %p182
      %p184 = scmp.ne.s32.totalorder %s170, %s171
      %p185 = scmp.eq.s32.totalorder %s22, 2
      %p186 = por %p184, %p185
      %p188 = scmp.ne.s32.totalorder %s171, %s187
      %p189 = scmp.eq.s32.totalorder %s22, 0
      %p190 = por %p188, %p189
      %p191 = scmp.le.s32.totalorder 1, %s16
      %p192 = scmp.lt.s32.totalorder %s16, 4
      %p193 = pnand %p191, %p192
      %p194 = pneg %p193
      // Predicated region
      $region9: #{tpu_custom_call.1} parent=5 // pred_check
        _
      $region10: #{tpu_custom_call.1} parent=5 // pred_check_branch
        %196 = sbr.rel (%p193) target = $region12
      $region11: #{tpu_custom_call.1} parent=5 // pred_region
        %s197 = ssub.s32 %s16, 1
        // Predicated region
        $region13: #{tpu_custom_call.1} parent=11 // pred_check
          %p198 = pneg %p89
        $region14: #{tpu_custom_call.1} parent=11 // pred_check_branch
          %200 = sbr.rel (%p198) target = $region16
        $region15: #{tpu_custom_call.1} parent=11 // pred_region
          _
        $region16: #{tpu_custom_call.1} parent=11 // pred_fallthru
          _
        // Predicated region
        $region17: #{tpu_custom_call.1} parent=11 // pred_check
          %p201 = pneg %p110
        $region18: #{tpu_custom_call.1} parent=11 // pred_check_branch
          %203 = sbr.rel (%p201) target = $region20
        $region19: #{tpu_custom_call.1} parent=11 // pred_region
          _
        $region20: #{tpu_custom_call.1} parent=11 // pred_fallthru
          _
        // Predicated region
        $region21: #{tpu_custom_call.1} parent=11 // pred_check
          %p204 = pneg %p131
        $region22: #{tpu_custom_call.1} parent=11 // pred_check_branch
          %206 = sbr.rel (%p204) target = $region24
        $region23: #{tpu_custom_call.1} parent=11 // pred_region
          _
        $region24: #{tpu_custom_call.1} parent=11 // pred_fallthru
          _
      $region12: #{tpu_custom_call.1} parent=5 // pred_fallthru
        _
      %p207 = scmp.lt.s32.totalorder %s16, 3
      // Predicated region
      $region25: #{tpu_custom_call.1} parent=5 // pred_check
        %p208 = pneg %p207
      $region26: #{tpu_custom_call.1} parent=5 // pred_check_branch
        %210 = sbr.rel (%p208) target = $region28
      $region27: #{tpu_custom_call.1} parent=5 // pred_region
        // Predicated region
        $region29: #{tpu_custom_call.1} parent=27 // pred_check
          %p211 = pneg %p36
        $region30: #{tpu_custom_call.1} parent=27 // pred_check_branch
          %213 = sbr.rel (%p211) target = $region32
        $region31: #{tpu_custom_call.1} parent=27 // pred_region
          %p214 = scmp.lt.s32.totalorder %s16, 2
          %s215 = scalar_select %p214, %s16, 2
          %s216 = smul.addr %s215, 8
          %s217 = scalar_lea.vmem %s0, %s216
        $region32: #{tpu_custom_call.1} parent=27 // pred_fallthru
          _
        // Predicated region
        $region33: #{tpu_custom_call.1} parent=27 // pred_check
          %p218 = pneg %p62
        $region34: #{tpu_custom_call.1} parent=27 // pred_check_branch
          %220 = sbr.rel (%p218) target = $region36
        $region35: #{tpu_custom_call.1} parent=27 // pred_region
          %p221 = scmp.lt.s32.totalorder %s16, 2
          %s222 = scalar_select %p221, %s16, 2
          %s223 = smul.addr %s222, 8
          %s224 = scalar_lea.vmem %s1, %s223
        $region36: #{tpu_custom_call.1} parent=27 // pred_fallthru
          _
      $region28: #{tpu_custom_call.1} parent=5 // pred_fallthru
        _
      %p225 = scmp.le.s32.totalorder 1, %s16
      %p226 = scmp.lt.s32.totalorder %s16, 4
      %p227 = pnand %p225, %p226
      %p228 = pneg %p227
      // Predicated region
      $region37: #{tpu_custom_call.1} parent=5 // pred_check
        _
      $region38: #{tpu_custom_call.1} parent=5 // pred_check_branch
        %230 = sbr.rel (%p227) target = $region40
      $region39: #{tpu_custom_call.1} parent=5 // pred_region
        %s231 = ssub.s32 %s16, 1
        %p232 = scmp.lt.s32.totalorder %s21, 2
        %s233 = scalar_select %p232, %s21, 2
        %s234 = smul.addr %s233, 8
        %s235 = scalar_lea.vmem %s0, %s234
        %p236 = pneg %p42
        %p237 = pneg %p39
        %p238 = scmp.lt.s32.totalorder %s21, 2
        %s239 = scalar_select %p238, %s21, 2
        %s240 = smul.addr %s239, 8
        %s241 = scalar_lea.vmem %s1, %s240
        %p242 = pneg %p68
        %p243 = pneg %p65
        %p244 = pneg %p89
        %p245 = pneg %p86
        %p246 = pneg %p110
        %p247 = pneg %p107
        %p248 = pneg %p131
        %p249 = pneg %p128
        %p250 = pneg %p157
        %p251 = pneg %p154
        %s252 = sand.u32 %s144, 1
        %s253 = scalar_lea.sflag [#allocation3], %s252
        %s254 = sand.u32 %s144, 1
        %s255 = smul.addr %s254, 8
        %s256 = scalar_lea.vmem [#allocation2], %s255
        %p257 = pneg %p183
        %p258 = pneg %p180
        %p259 = scmp.lt.s32.totalorder %s21, 2
        %s260 = scalar_select %p259, %s21, 2
        %s261 = smul.addr %s260, 8
        %s262 = scalar_lea.vmem %s6, %s261
        %p263 = scmp.lt.s32.totalorder %s21, 2
        %s264 = scalar_select %p263, %s21, 2
        %s265 = smul.addr %s264, 8
        %s266 = scalar_lea.vmem %s0, %s265
        %p267 = scmp.lt.s32.totalorder %s21, 2
        %s268 = scalar_select %p267, %s21, 2
        %s269 = smul.addr %s268, 8
        %s270 = scalar_lea.vmem %s1, %s269
        %p271 = scmp.lt.s32.totalorder %s21, 2
        %s272 = scalar_select %p271, %s21, 2
        %s273 = smul.addr %s272, 8
        %s274 = scalar_lea.vmem %s6, %s273
        %v275 = vld [vmem:[%s266] sm:$0xff]
        %v276 = vld [vmem:[%s270] sm:$0xff]
        %v277 = vld [vmem:[%s2] sm:$0xff]
        %v278 = vld [vmem:[%s2 + $0x8] sm:$0xff]
        %v279 = vld [vmem:[%s2 + $0x10] sm:$0xff]
        %v280 = vld [vmem:[%s2 + $0x18] sm:$0xff]
        %v281 = vld [vmem:[%s3] sm:$0xff]
        %v282 = vld [vmem:[%s3 + $0x8] sm:$0xff]
        %v283 = vld [vmem:[%s4] sm:$0x3]
        %vm284 = vcmask 261120
        %v286 = vsel %vm284, %v275, 0
        %288 = vmatprep.subr.mxu0 0.0
        %289 = vmatpush1.msra.mxu0 %v277
        %290 = vmatprep.subr.mxu0 0.0
        %291 = vmatpush1.msra.mxu0 %v278
        %292 = vmatprep.subr.mxu0 0.0
        %293 = vmatpush1.msra.mxu0 %v279
        %294 = vmatprep.subr.mxu0 0.0
        %295 = vmatpush1.msra.mxu0 %v280
        %296 = vmatprep.subr.mxu0 0.0
        %297 = vmatpush1.msra.mxu0 0.0
        %298 = vmatprep.subr.mxu0 0.0
        %299 = vmatpush1.msra.mxu0 0.0
        %300 = vmatprep.subr.mxu0 0.0
        %301 = vmatpush1.msra.mxu0 0.0
        %302 = vmatprep.subr.mxu0 0.0
        %303 = vmatpush1.msra.mxu0 0.0
        %304 = vmatprep.subr.mxu0 0.0
        %305 = vmatpush1.msra.mxu0 0.0
        %306 = vmatprep.subr.mxu0 0.0
        %307 = vmatpush1.msra.mxu0 0.0
        %308 = vmatprep.subr.mxu0 0.0
        %309 = vmatpush1.msra.mxu0 0.0
        %310 = vmatprep.subr.mxu0 0.0
        %311 = vmatpush1.msra.mxu0 0.0
        %312 = vmatprep.subr.mxu0 0.0
        %313 = vmatpush1.msra.mxu0 0.0
        %314 = vmatprep.subr.mxu0 0.0
        %315 = vmatpush1.msra.mxu0 0.0
        %316 = vmatprep.subr.mxu0 0.0
        %317 = vmatpush1.msra.mxu0 0.0
        %318 = vmatprep.subr.mxu0 0.0
        %319 = vmatpush1.msra.mxu0 0.0
        %320 = vmatprep.subr.mxu0 0.0
        %321 = vmatpush1.msra.mxu0 0.0
        %322 = vmatprep.subr.mxu0 0.0
        %323 = vmatpush1.msra.mxu0 0.0
        %324 = vmatprep.subr.mxu0 0.0
        %325 = vmatpush1.msra.mxu0 0.0
        %326 = vmatprep.subr.mxu0 0.0
        %327 = vmatpush1.msra.mxu0 0.0
        %328 = vmatprep.subr.mxu0 0.0
        %329 = vmatpush1.msra.mxu0 0.0
        %330 = vmatprep.subr.mxu0 0.0
        %331 = vmatpush1.msra.mxu0 0.0
        %332 = vmatprep.subr.mxu0 0.0
        %333 = vmatpush1.msra.mxu0 0.0
        %334 = vmatprep.subr.mxu0 0.0
        %335 = vmatpush1.msra.mxu0 0.0
        %336 = vmatprep.subr.mxu0 0.0
        %337 = vmatpush1.msra.mxu0 0.0
        %338 = vmatprep.subr.mxu0 0.0
        %339 = vmatpush1.msra.mxu0 0.0
        %340 = vmatprep.subr.mxu0 0.0
        %341 = vmatpush1.msra.mxu0 0.0
        %342 = vmatprep.subr.mxu0 0.0
        %343 = vmatpush1.msra.mxu0 0.0
        %344 = vmatprep.subr.mxu0 0.0
        %345 = vmatpush1.msra.mxu0 0.0
        %346 = vmatprep.subr.mxu0 0.0
        %347 = vmatpush1.msra.mxu0 0.0
        %348 = vmatprep.subr.mxu0 0.0
        %349 = vmatpush1.msra.mxu0 0.0
        %350 = vmatprep.subr.mxu0 0.0
        %351 = vmatpush1.msra.mxu0 0.0
        %352 = vmatprep.mubr.f32.mxu0 0.0
        %353 = vmatmul.mubr.f32.gmra.mrb[0].mxu0 %v286
        %v354 = vpop.f32.mrb[0].mxu0
        %v355 = vadd.f32 0.0, %v354
        %v356 = vpop.f32.mrb[0].mxu0
        %357 = vdwg.mxu0
        %359 = vset.pattern.permute.xlu0 0
        %360 = vperm.xlu0 %359, %v276
        %v361 = vpop.permute.xlu0 %360
        %v363 = vlaneseq
        %v364 = vshrl.u32 %v363, 7
        %v365 = vsub.s32 0, %v364
        %v366 = vrot.slane %v283, %v365
        %v367 = vmul.f32 %v361, %v366
        %368 = vset.pattern.permute.xlu0 1
        %369 = vperm.xlu0 %368, %v276
        %v370 = vpop.permute.xlu0 %369
        %v372 = vlaneseq
        %v373 = vshrl.u32 %v372, 7
        %v374 = vsub.s32 1, %v373
        %v375 = vrot.slane %v283, %v374
        %v376 = vmul.f32 %v370, %v375
        %v377 = vadd.f32 %v367, %v376
        %v378 = vmax.f32 %v377, 0.0
        %v379 = vmul.f32 %v355, %v378
        %vm380 = vcmask 130048
        %v381 = vsel %vm380, %v379, -inf
        %382 = vmax.xlane.f32.xlu0 %v381
        %v383 = vpop.xlane.xlu0 %382
        %v384 = vsub.f32 %v379, %v383
        %v385 = vmul.f32 %v384, 1.442695
        %v386 = vpow.pop %v385
        %v387 = vsel %vm380, %v386, 0.0
        %388 = vadd.xlane.f32.xlu0 %v387
        %v389 = vpop.xlane.xlu0 %388
        %v390 = vrcp.pop %v389
        %v391 = vmul.f32 %v386, %v390
        %v392 = vsub.f32 %v391, 0.0025
        %v393 = vmax.f32 %v392, 0.0
        %v394 = vmul.f32 %v393, %v391
        %v395 = vand.u32 2147483647, %v392
        %v396 = vadd.f32 %v395, 1e-12
        %v397 = vrcp.pop %v396
        %v398 = vmul.f32 %v394, %v397
        %v399 = vand.u32 2147483647, %v398
        %v400 = vsel %vm380, %v399, 0.0
        %401 = vadd.xlane.f32.xlu0 %v400
        %v402 = vpop.xlane.xlu0 %401
        %v403 = vmax.f32 %v402, 1e-12
        %v404 = vrcp.pop %v403
        %v405 = vmul.f32 %v398, %v404
        %406 = vst.msk [vmem:[%s274] sm:$0xff] %vm380, %v405
        %v408 = vsel %vm380, %v405, 0
        %410 = vmatprep.subr.mxu0 0.0
        %411 = vmatpush1.msra.mxu0 %v281
        %412 = vmatprep.subr.mxu0 0.0
        %413 = vmatpush1.msra.mxu0 %v282
        %414 = vmatprep.subr.mxu0 0.0
        %415 = vmatpush1.msra.mxu0 0.0
        %416 = vmatprep.subr.mxu0 0.0
        %417 = vmatpush1.msra.mxu0 0.0
        %418 = vmatprep.subr.mxu0 0.0
        %419 = vmatpush1.msra.mxu0 0.0
        %420 = vmatprep.subr.mxu0 0.0
        %421 = vmatpush1.msra.mxu0 0.0
        %422 = vmatprep.subr.mxu0 0.0
        %423 = vmatpush1.msra.mxu0 0.0
        %424 = vmatprep.subr.mxu0 0.0
        %425 = vmatpush1.msra.mxu0 0.0
        %426 = vmatprep.subr.mxu0 0.0
        %427 = vmatpush1.msra.mxu0 0.0
        %428 = vmatprep.subr.mxu0 0.0
        %429 = vmatpush1.msra.mxu0 0.0
        %430 = vmatprep.subr.mxu0 0.0
        %431 = vmatpush1.msra.mxu0 0.0
        %432 = vmatprep.subr.mxu0 0.0
        %433 = vmatpush1.msra.mxu0 0.0
        %434 = vmatprep.subr.mxu0 0.0
        %435 = vmatpush1.msra.mxu0 0.0
        %436 = vmatprep.subr.mxu0 0.0
        %437 = vmatpush1.msra.mxu0 0.0
        %438 = vmatprep.subr.mxu0 0.0
        %439 = vmatpush1.msra.mxu0 0.0
        %440 = vmatprep.subr.mxu0 0.0
        %441 = vmatpush1.msra.mxu0 0.0
        %442 = vmatprep.subr.mxu0 0.0
        %443 = vmatpush1.msra.mxu0 0.0
        %444 = vmatprep.subr.mxu0 0.0
        %445 = vmatpush1.msra.mxu0 0.0
        %446 = vmatprep.subr.mxu0 0.0
        %447 = vmatpush1.msra.mxu0 0.0
        %448 = vmatprep.subr.mxu0 0.0
        %449 = vmatpush1.msra.mxu0 0.0
        %450 = vmatprep.subr.mxu0 0.0
        %451 = vmatpush1.msra.mxu0 0.0
        %452 = vmatprep.subr.mxu0 0.0
        %453 = vmatpush1.msra.mxu0 0.0
        %454 = vmatprep.subr.mxu0 0.0
        %455 = vmatpush1.msra.mxu0 0.0
        %456 = vmatprep.subr.mxu0 0.0
        %457 = vmatpush1.msra.mxu0 0.0
        %458 = vmatprep.subr.mxu0 0.0
        %459 = vmatpush1.msra.mxu0 0.0
        %460 = vmatprep.subr.mxu0 0.0
        %461 = vmatpush1.msra.mxu0 0.0
        %462 = vmatprep.subr.mxu0 0.0
        %463 = vmatpush1.msra.mxu0 0.0
        %464 = vmatprep.subr.mxu0 0.0
        %465 = vmatpush1.msra.mxu0 0.0
        %466 = vmatprep.subr.mxu0 0.0
        %467 = vmatpush1.msra.mxu0 0.0
        %468 = vmatprep.subr.mxu0 0.0
        %469 = vmatpush1.msra.mxu0 0.0
        %470 = vmatprep.subr.mxu0 0.0
        %471 = vmatpush1.msra.mxu0 0.0
        %472 = vmatprep.subr.mxu0 0.0
        %473 = vmatpush1.msra.mxu0 0.0
        %474 = vmatprep.mubr.f32.mxu0 0.0
        %475 = vmatmul.mubr.f32.gmra.mrb[0].mxu0 %v408
        %v476 = vpop.f32.mrb[0].mxu0
        %v477 = vadd.f32 0.0, %v476
        %v478 = vpop.f32.mrb[0].mxu0
        %479 = vdwg.mxu0
        %480 = vst.msk [vmem:[%s256] sm:$0xff] %vm284, %v477
        %s481 = sand.u32 %s144, 1
        %s482 = scalar_lea.sflag [#allocation3], %s481
        %s483 = sand.u32 %s144, 1
        %s484 = smul.addr %s483, 8
        %s485 = scalar_lea.vmem [#allocation2], %s484
        %p486 = scmp.lt.s32.totalorder %s21, 2
        %s487 = scalar_select %p486, %s21, 2
        %s488 = smul.addr %s487, 8
        %s489 = scalar_lea.vmem %s6, %s488
        // Predicated region
        $region41: #{tpu_custom_call.1} parent=39 // pred_check
          %p490 = pneg %p154
        $region42: #{tpu_custom_call.1} parent=39 // pred_check_branch
          %492 = sbr.rel (%p490) target = $region44
        $region43: #{tpu_custom_call.1} parent=39 // pred_region
          %s494 = ssub.s32 128, 128
          %495 = vsyncadd %s482, %s494
          %s496 = smul.addr %s21, 128
          %s497 = scalar_lea.hbm %s5, %s496
          %s499 = sshll.u32 %s485, 4
          %s500 = int_to_ptr.vmem [resolvable:$true] %s499
          %502 = dma.vmem_to_hbm [thread:$0]  %s500, 128, %s497, %s482
        $region44: #{tpu_custom_call.1} parent=39 // pred_fallthru
          _
        // Predicated region
        $region45: #{tpu_custom_call.1} parent=39 // pred_check
          %p503 = pneg %p180
        $region46: #{tpu_custom_call.1} parent=39 // pred_check_branch
          %505 = sbr.rel (%p503) target = $region48
        $region47: #{tpu_custom_call.1} parent=39 // pred_region
          _
        $region48: #{tpu_custom_call.1} parent=39 // pred_fallthru
          _
      $region40: #{tpu_custom_call.1} parent=5 // pred_fallthru
        _
      %p506 = scmp.le.s32.totalorder 2, %s16
      // Predicated region
      $region49: #{tpu_custom_call.1} parent=5 // pred_check
        %p507 = pneg %p506
      $region50: #{tpu_custom_call.1} parent=5 // pred_check_branch
        %509 = sbr.rel (%p507) target = $region52
      $region51: #{tpu_custom_call.1} parent=5 // pred_region
        %s510 = ssub.s32 %s16, 2
        // Predicated region
        $region53: #{tpu_custom_call.1} parent=51 // pred_check
          %p511 = pneg %p160
        $region54: #{tpu_custom_call.1} parent=51 // pred_check_branch
          %513 = sbr.rel (%p511) target = $region56
        $region55: #{tpu_custom_call.1} parent=51 // pred_region
          %s514 = sand.u32 %s145, 1
          %s515 = scalar_lea.sflag [#allocation3], %s514
          %s516 = sand.u32 %s145, 1
          %s517 = smul.addr %s516, 8
          %s518 = scalar_lea.vmem [#allocation2], %s517
          %519 = dma.done %s515, 128
        $region56: #{tpu_custom_call.1} parent=51 // pred_fallthru
          _
        // Predicated region
        $region57: #{tpu_custom_call.1} parent=51 // pred_check
          %p520 = pneg %p186
        $region58: #{tpu_custom_call.1} parent=51 // pred_check_branch
          %522 = sbr.rel (%p520) target = $region60
        $region59: #{tpu_custom_call.1} parent=51 // pred_region
          %p523 = scmp.lt.s32.totalorder %s22, 2
          %s524 = scalar_select %p523, %s22, 2
          %s525 = smul.addr %s524, 8
          %s526 = scalar_lea.vmem %s6, %s525
        $region60: #{tpu_custom_call.1} parent=51 // pred_fallthru
          _
      $region52: #{tpu_custom_call.1} parent=5 // pred_fallthru
        _
    $region6: #{tpu_custom_call.1} parent=1 // loop_footer
      %s20 = sadd.s32 1, %s16
    $region7: #{tpu_custom_call.1} parent=1 // loop_footer_branch
      %15 = sbr.rel target = $region3
    $region8: #{tpu_custom_call.1} parent=1 // loop_exit
      _
    %527 = vsyncpa [#allocation3], 1
    %s528 = scalar_lea.sflag [#allocation3], 1
    %529 = vsyncpa %s528, 1

</llo_original>
